<compile_context>
chip_gen: v6e
topology: v6e:2x2x1
jax: 0.10.0
libtpu: 0.0.40
codegen_flags: <defaults>
</compile_context>

<pallas_src>
import jax
import jax.numpy as jnp
from jax.experimental import pallas as pl
from jax.experimental.pallas import tpu as pltpu

N_SERIES = 21
EPS = 1e-8
_N_TENSORCORES = 2  # v7x megacore; harmless (slightly conservative BB) on 1-TC v5e/v6e


def _make_revin_kernel(T):
    inv_t = 1.0 / T
    # torch.var default is unbiased (divides by T-1); T == 1 yields NaN, matching PyTorch.
    inv_tm1 = 1.0 / (T - 1) if T > 1 else float("nan")

    def kernel(x_ref, st_ref, gamma_ref, beta_ref, o_ref):
        # x_ref:     (BB, T*C) lane-dense flat view of the (BB, T, C) block
        # st_ref:    (C, T*C)  0/1 selector, st[c, t*C + c'] = (c == c')
        # gamma_ref: (1, C), beta_ref: (1, C)
        x = x_ref[...].astype(jnp.float32)
        st = st_ref[...]

        # Per-(batch, series) time reduction on the (otherwise idle) MXU:
        # contract the flat T*C axis of x against the T*C axis of S^T.
        dn = (((1,), (1,)), ((), ()))
        sums = jax.lax.dot_general(x, st, dn,
                                   preferred_element_type=jnp.float32)        # (BB, C)
        sumsq = jax.lax.dot_general(x * x, st, dn,
                                    preferred_element_type=jnp.float32)       # (BB, C)

        mean = sums * jnp.float32(inv_t)
        # Single-pass unbiased variance: (sum(x^2) - T*mean^2) / (T-1), in f32.
        var = (sumsq - mean * sums) * jnp.float32(inv_tm1)
        var = jnp.maximum(var, jnp.float32(0.0))           # guard cancellation -> rsqrt(neg)
        inv_std = jax.lax.rsqrt(var + jnp.float32(EPS))    # EUP slot (free-ish)

        gamma = gamma_ref[...].astype(jnp.float32)         # (1, C)
        beta = beta_ref[...].astype(jnp.float32)           # (1, C)

        # out = (x - mean) * inv_std * gamma + beta  ==  x * scale + shift
        scale = gamma * inv_std                            # (BB, C)
        shift = beta - mean * scale                        # (BB, C)

        # Broadcast per-(b, c) scale/shift back to the flat (BB, T*C) lanes via
        # S^T on the MXU -- no in-kernel reshape/transpose (no relayout).
        scale_full = jnp.dot(scale, st, preferred_element_type=jnp.float32)   # (BB, T*C)
        shift_full = jnp.dot(shift, st, preferred_element_type=jnp.float32)   # (BB, T*C)

        o_ref[...] = (x * scale_full + shift_full).astype(o_ref.dtype)

    return kernel


def _pick_batch_block(B, T, C, in_itemsize, vmem_block_budget=8 << 20):
    """Pick the batch block BB and a matching scoped-VMEM limit.

    BB must be a multiple of 8 (sublane tile) or equal B so the (BB, T*C)
    BlockSpec is legal.  The footprint accounts for in-kernel f32 temporaries
    (matters for bf16 inputs and v7x's 64 MiB VMEM).
    """
    tc = T * C
    lane_tc = ((tc + 127) // 128) * 128
    # double-buffered input + output blocks (input dtype) + ~4 f32 full-tile temps
    per_row = 4 * lane_tc * in_itemsize + 4 * lane_tc * 4
    bb_cap = max(1, vmem_block_budget // per_row)

    valid = sorted({B} | {d for d in range(8, B + 1, 8) if B % d == 0})

    def steps(bb):
        return B // bb

    bb = min(valid)
    for pred in (
        # (a) fits budget, even grid, >= 2 steps per TensorCore (v7x megacore)
        lambda b_: b_ <= bb_cap and steps(b_) % 2 == 0 and steps(b_) >= 2 * _N_TENSORCORES,
        # (b) fits budget, even grid with >= 2 steps
        lambda b_: b_ <= bb_cap and steps(b_) % 2 == 0 and steps(b_) >= 2,
        # (c) just fits the budget
        lambda b_: b_ <= bb_cap,
    ):
        fitting = [b_ for b_ in valid if pred(b_)]
        if fitting:
            bb = max(fitting)
            break

    # Scoped VMEM: actual working set + headroom; stays within every
    # generation's physical VMEM (v7x: 64 MiB per TensorCore).
    sublane_c = ((C + 7) // 8) * 8
    const_bytes = 2 * sublane_c * lane_tc * 4 + 8 * 128 * 4   # S^T (dbl-buffered) + gamma/beta
    working = bb * per_row + const_bytes
    vmem_limit = int(min(48 << 20, max(16 << 20, working + (8 << 20))))
    return bb, vmem_limit


def revin_forward(batch_x, gamma, beta):
    """RevIN forward ('forward' mode): normalize over time, per-series affine."""
    B, T, C = batch_x.shape
    tc = T * C

    # Metadata-only flatten of the contiguous (T, C) tail -> lane-dense last dim.
    x2 = batch_x.reshape(B, tc)
    gamma2d = gamma.reshape(1, C).astype(jnp.float32)
    beta2d = beta.reshape(1, C).astype(jnp.float32)

    # S^T[c, t*C + c'] = 1 iff c == c'; used for both the time reduction and
    # the broadcast back to the flat T*C lane axis.
    sel_t = jnp.tile(jnp.eye(C, dtype=jnp.float32), (1, T))   # (C, T*C)

    itemsize = jnp.dtype(batch_x.dtype).itemsize
    BB, vmem_limit = _pick_batch_block(B, T, C, itemsize)
    grid = (B // BB,)

    cost = pl.CostEstimate(
        flops=8 * B * tc * C + 6 * B * tc,                      # 4 small MXU matmuls + VPU
        transcendentals=B * C,                                  # rsqrt
        bytes_accessed=2 * B * tc * itemsize + (C * tc + 2 * C) * 4,
    )

    out2 = pl.pallas_call(
        _make_revin_kernel(T),
        out_shape=jax.ShapeDtypeStruct((B, tc), batch_x.dtype),
        grid_spec=pltpu.PrefetchScalarGridSpec(
            num_scalar_prefetch=0,
            grid=grid,
            in_specs=[
                pl.BlockSpec((BB, tc), lambda b: (b, 0)),
                pl.BlockSpec((C, tc), lambda b: (0, 0)),
                pl.BlockSpec((1, C), lambda b: (0, 0)),
                pl.BlockSpec((1, C), lambda b: (0, 0)),
            ],
            out_specs=pl.BlockSpec((BB, tc), lambda b: (b, 0)),
        ),
        compiler_params=pltpu.CompilerParams(
            dimension_semantics=("parallel",),
            vmem_limit_bytes=vmem_limit,
        ),
        cost_estimate=cost,
    )(x2, sel_t, gamma2d, beta2d)

    return out2.reshape(B, T, C)


def revin_forward_ref(batch_x, gamma, beta):
    """Pure-JAX reference matching the PyTorch forward ('forward' mode)."""
    x = batch_x.astype(jnp.float32)
    T = x.shape[1]
    avg = jnp.mean(x, axis=1, keepdims=True)
    var = jnp.sum((x - avg) ** 2, axis=1, keepdims=True) / (T - 1)   # unbiased
    temp = (x - avg) / jnp.sqrt(var + EPS)
    return (temp * gamma + beta).astype(batch_x.dtype)


if __name__ == "__main__":
    key = jax.random.PRNGKey(0)
    B, T, C = 2, 8, N_SERIES
    kx, kg, kb = jax.random.split(key, 3)

    batch_x = jax.random.normal(kx, (B, T, C), dtype=jnp.float32)
    # nn.Parameter init is ones/zeros; perturb deterministically so the affine
    # path is actually exercised by the correctness check.
    gamma = 1.0 + 0.1 * jax.random.normal(kg, (C,), dtype=jnp.float32)
    beta = 0.05 * jax.random.normal(kb, (C,), dtype=jnp.float32)

    out = jax.block_until_ready(revin_forward(batch_x, gamma, beta))
    ref = revin_forward_ref(batch_x, gamma, beta)

    assert out.shape == (B, T, C)
    assert jnp.allclose(out, ref, atol=1e-5, rtol=1e-5), "mismatch vs reference"

    print("KERNEL_OK")
</pallas_src>

<mosaic_0001>
module attributes {stable_mosaic.version = 11 : i64} {
  func.func @kernel(%arg0: i32, %arg1: memref<2x168xf32, #tpu.memory_space<vmem>>, %arg2: memref<21x168xf32, #tpu.memory_space<vmem>>, %arg3: memref<1x21xf32, #tpu.memory_space<vmem>>, %arg4: memref<1x21xf32, #tpu.memory_space<vmem>>, %arg5: memref<2x168xf32, #tpu.memory_space<vmem>>) attributes {dimension_semantics = [#tpu.dimension_semantics<parallel>], iteration_bounds = array<i64: 1>, scalar_prefetch = 0 : i64, scratch_operands = 0 : i64, tpu.core_type = #tpu.core_type<tc>, window_params = [{transform_indices = @transform_0, window_bounds = array<i64: 2, 168>}, {pipeline_mode = #tpu.pipeline_mode<synchronous>, transform_indices = @transform_1, window_bounds = array<i64: 21, 168>}, {pipeline_mode = #tpu.pipeline_mode<synchronous>, transform_indices = @transform_2, window_bounds = array<i64: 1, 21>}, {pipeline_mode = #tpu.pipeline_mode<synchronous>, transform_indices = @transform_3, window_bounds = array<i64: 1, 21>}, {transform_indices = @transform_4, window_bounds = array<i64: 2, 168>}]} {
    %c0 = arith.constant 0 : index
    %c0_0 = arith.constant 0 : index
    %0 = vector.load %arg1[%c0, %c0_0] : memref<2x168xf32, #tpu.memory_space<vmem>>, vector<2x168xf32>
    %c0_1 = arith.constant 0 : index
    %c0_2 = arith.constant 0 : index
    %1 = vector.load %arg2[%c0_1, %c0_2] : memref<21x168xf32, #tpu.memory_space<vmem>>, vector<21x168xf32>
    %cst = arith.constant dense<0.000000e+00> : vector<2x21xf32>
    %2 = tpu.matmul %0, %1, %cst {dimension_numbers = #tpu.dot_dimension_numbers<[1], [1], [0], [0], [0, 0, 1, 0], [], []>} : vector<2x168xf32>, vector<21x168xf32>, vector<2x21xf32> -> vector<2x21xf32>
    %3 = arith.mulf %0, %0 : vector<2x168xf32>
    %cst_3 = arith.constant dense<0.000000e+00> : vector<2x21xf32>
    %4 = tpu.matmul %3, %1, %cst_3 {dimension_numbers = #tpu.dot_dimension_numbers<[1], [1], [0], [0], [0, 0, 1, 0], [], []>} : vector<2x168xf32>, vector<21x168xf32>, vector<2x21xf32> -> vector<2x21xf32>
    %cst_4 = arith.constant 1.250000e-01 : f32
    %5 = vector.broadcast %cst_4 : f32 to vector<2x21xf32>
    %6 = arith.mulf %2, %5 : vector<2x21xf32>
    %7 = arith.mulf %6, %2 : vector<2x21xf32>
    %8 = arith.subf %4, %7 : vector<2x21xf32>
    %cst_5 = arith.constant 0.142857149 : f32
    %9 = vector.broadcast %cst_5 : f32 to vector<2x21xf32>
    %10 = arith.mulf %8, %9 : vector<2x21xf32>
    %cst_6 = arith.constant 0.000000e+00 : f32
    %11 = vector.broadcast %cst_6 : f32 to vector<2x21xf32>
    %12 = arith.maximumf %10, %11 : vector<2x21xf32>
    %cst_7 = arith.constant 9.99999993E-9 : f32
    %13 = vector.broadcast %cst_7 : f32 to vector<2x21xf32>
    %14 = arith.addf %12, %13 : vector<2x21xf32>
    %15 = math.rsqrt %14 : vector<2x21xf32>
    %c0_8 = arith.constant 0 : index
    %c0_9 = arith.constant 0 : index
    %16 = vector.load %arg3[%c0_8, %c0_9] : memref<1x21xf32, #tpu.memory_space<vmem>>, vector<1x21xf32>
    %c0_10 = arith.constant 0 : index
    %c0_11 = arith.constant 0 : index
    %17 = vector.load %arg4[%c0_10, %c0_11] : memref<1x21xf32, #tpu.memory_space<vmem>>, vector<1x21xf32>
    %18 = vector.broadcast %16 : vector<1x21xf32> to vector<2x21xf32>
    %19 = arith.mulf %18, %15 : vector<2x21xf32>
    %20 = arith.mulf %6, %19 : vector<2x21xf32>
    %21 = vector.broadcast %17 : vector<1x21xf32> to vector<2x21xf32>
    %22 = arith.subf %21, %20 : vector<2x21xf32>
    %cst_12 = arith.constant dense<0.000000e+00> : vector<2x168xf32>
    %23 = tpu.matmul %19, %1, %cst_12 {dimension_numbers = #tpu.dot_dimension_numbers<[1], [0], [0], [1], [0, 0, 1, 1], [], []>} : vector<2x21xf32>, vector<21x168xf32>, vector<2x168xf32> -> vector<2x168xf32>
    %cst_13 = arith.constant dense<0.000000e+00> : vector<2x168xf32>
    %24 = tpu.matmul %22, %1, %cst_13 {dimension_numbers = #tpu.dot_dimension_numbers<[1], [0], [0], [1], [0, 0, 1, 1], [], []>} : vector<2x21xf32>, vector<21x168xf32>, vector<2x168xf32> -> vector<2x168xf32>
    %25 = arith.mulf %0, %23 : vector<2x168xf32>
    %26 = arith.addf %25, %24 : vector<2x168xf32>
    %c0_14 = arith.constant 0 : index
    %c0_15 = arith.constant 0 : index
    %27 = vector.load %arg5[%c0_14, %c0_15] : memref<2x168xf32, #tpu.memory_space<vmem>>, vector<2x168xf32>
    tpu.vector_store %arg5[%c0_14, %c0_15], %26 {strides = array<i32>} : memref<2x168xf32, #tpu.memory_space<vmem>>, vector<2x168xf32>,
    return
  }
  func.func @transform_0(%arg0: i32) -> (i32, i32) {
    %c0_i32 = arith.constant 0 : i32
    %c0_i32_0 = arith.constant 0 : i32
    return %arg0, %c0_i32 : i32, i32
  }
  func.func @transform_1(%arg0: i32) -> (i32, i32) {
    %c0_i32 = arith.constant 0 : i32
    %c0_i32_0 = arith.constant 0 : i32
    %c0_i32_1 = arith.constant 0 : i32
    return %c0_i32, %c0_i32_0 : i32, i32
  }
  func.func @transform_2(%arg0: i32) -> (i32, i32) {
    %c0_i32 = arith.constant 0 : i32
    %c0_i32_0 = arith.constant 0 : i32
    %c0_i32_1 = arith.constant 0 : i32
    return %c0_i32, %c0_i32_0 : i32, i32
  }
  func.func @transform_3(%arg0: i32) -> (i32, i32) {
    %c0_i32 = arith.constant 0 : i32
    %c0_i32_0 = arith.constant 0 : i32
    %c0_i32_1 = arith.constant 0 : i32
    return %c0_i32, %c0_i32_0 : i32, i32
  }
  func.func @transform_4(%arg0: i32) -> (i32, i32) {
    %c0_i32 = arith.constant 0 : i32
    %c0_i32_0 = arith.constant 0 : i32
    return %arg0, %c0_i32 : i32, i32
  }
}

</mosaic_0001>

<llo_original>
// kernel: tpu_custom_call.1
$region0: #{tpu_custom_call.1}
  #allocation0 [shape = 'u32[]', space=smem, size = 0x4, offset = 0x4, fixed_abs, tag = 'smem constant byte address 0x4 - core index']
  #allocation1 [shape = 'u32[144,128]{1,0:T(1,128)}', space=vmem, size = 0x12000, scoped, tag = 'internal scratch']
  %s0 = inlined_call_operand.hbm [shape: f32[2,168], index: 0, kind: input, shape index: {}]
  %s1 = inlined_call_operand.hbm [shape: f32[21,168], index: 1, kind: input, shape index: {}]
  %s2 = inlined_call_operand.vmem [shape: f32[1,21], index: 2, kind: input, shape index: {}]
  %s3 = inlined_call_operand.vmem [shape: f32[1,21], index: 3, kind: input, shape index: {}]
  %s4 = inlined_call_operand.hbm [shape: f32[2,168], index: 4, kind: output, shape index: {}]
  %s5 = sld [smem:[#allocation0]]
  $region34: #{tpu_custom_call.1} parent=0
    _
  %s7 = ssub.s32 1, %s5
  %s8 = scalar_select 0, %s7, %s5
  $region1: #{tpu_custom_call.1} parent=0
    #allocation2 [shape = 'u8[2048]{0}', space=vmem, size = 0x800, scoped, tag = 'input window, operand 0, single buffered']
    #allocation3 [shape = 's32[1]{0}', space=sflag, size = 0x4, scoped, tag = 'scoped memory for tpu_custom_call.1']
    #allocation4 [shape = 's32[1]{0}', space=sflag, size = 0x4, scoped, tag = 'scoped memory for tpu_custom_call.1']
    #allocation5 [shape = 'u8[24576]{0}', space=vmem, size = 0x6000, scoped, tag = 'input window, operand 1, single buffered']
    #allocation6 [shape = 's32[1]{0}', space=sflag, size = 0x4, scoped, tag = 'scoped memory for tpu_custom_call.1']
    #allocation7 [shape = 'u8[2048]{0}', space=vmem, size = 0x800, scoped, tag = 'output window, operand 0, single buffered']
    %9 = vsyncpa [#allocation3], 0
    %10 = vsyncpa [#allocation6], 0
    %11 = vsyncpa [#allocation4], 0
    // Predicated region
    $region2: #{tpu_custom_call.1} parent=1 // pred_check
      _
    $region3: #{tpu_custom_call.1} parent=1 // pred_check_branch
      %13 = sbr.rel (0) target = $region5
    $region4: #{tpu_custom_call.1} parent=1 // pred_region
      %s15 = ssub.s32 64, 64
      %16 = vsyncadd [#allocation3], %s15
      %s18 = sshll.u32 [#allocation2], 4
      %s19 = int_to_ptr.vmem [resolvable:$true] %s18
      %21 = dma.hbm_to_vmem [thread:$0]  %s0, 64, %s19, [#allocation3]
    $region5: #{tpu_custom_call.1} parent=1 // pred_fallthru
      _
    // Predicated region
    $region6: #{tpu_custom_call.1} parent=1 // pred_check
      _
    $region7: #{tpu_custom_call.1} parent=1 // pred_check_branch
      %23 = sbr.rel (0) target = $region9
    $region8: #{tpu_custom_call.1} parent=1 // pred_region
      %s25 = ssub.s32 768, 768
      %26 = vsyncadd [#allocation6], %s25
      %s27 = sshll.u32 [#allocation5], 4
      %s28 = int_to_ptr.vmem [resolvable:$true] %s27
      %33 = dma.hbm_to_vmem [thread:$0]  %s1, 768, %s28, [#allocation6], 256, 256, 16
    $region9: #{tpu_custom_call.1} parent=1 // pred_fallthru
      _
    // Predicated region
    $region10: #{tpu_custom_call.1} parent=1 // pred_check
      _
    $region11: #{tpu_custom_call.1} parent=1 // pred_check_branch
      %35 = sbr.rel (0) target = $region13
    $region12: #{tpu_custom_call.1} parent=1 // pred_region
      _
    $region13: #{tpu_custom_call.1} parent=1 // pred_fallthru
      _
    // Predicated region
    $region14: #{tpu_custom_call.1} parent=1 // pred_check
      _
    $region15: #{tpu_custom_call.1} parent=1 // pred_check_branch
      %37 = sbr.rel (0) target = $region17
    $region16: #{tpu_custom_call.1} parent=1 // pred_region
      _
    $region17: #{tpu_custom_call.1} parent=1 // pred_fallthru
      _
    // Predicated region
    $region18: #{tpu_custom_call.1} parent=1 // pred_check
      _
    $region19: #{tpu_custom_call.1} parent=1 // pred_check_branch
      %39 = sbr.rel (0) target = $region21
    $region20: #{tpu_custom_call.1} parent=1 // pred_region
      %40 = dma.done [#allocation3], 64
    $region21: #{tpu_custom_call.1} parent=1 // pred_fallthru
      _
    // Predicated region
    $region22: #{tpu_custom_call.1} parent=1 // pred_check
      _
    $region23: #{tpu_custom_call.1} parent=1 // pred_check_branch
      %42 = sbr.rel (0) target = $region25
    $region24: #{tpu_custom_call.1} parent=1 // pred_region
      %43 = dma.done [#allocation6], 768
    $region25: #{tpu_custom_call.1} parent=1 // pred_fallthru
      _
    %v44 = vld [vmem:[#allocation2] sm:$0xf]
    %v45 = vld [vmem:[#allocation5] sm:$0xff]
    %v46 = vld [vmem:[#allocation5 + $0x8] sm:$0xff]
    %v47 = vld [vmem:[#allocation5 + $0x10] sm:$0xff]
    %v48 = vld [vmem:[#allocation5 + $0x18] sm:$0xff]
    %v49 = vld [vmem:[#allocation5 + $0x20] sm:$0x1f]
    %v50 = vld [vmem:[#allocation5 + $0x28] sm:$0x1f]
    %v53 = vunpack.c.l.s4 1983009808
    %v54 = vunpack.c.0.s8 %v53
    %v55 = vlaneseq
    %v56 = vshrl.u32 %v55, 7
    %v57 = vsub.s32 %v54, %v56
    %v58 = vrot.slane %v44, %v57
    %v59 = vcombine.high %v58, %v58
    %vm61 = vcmask 326656
    %v62 = vsel %vm61, %v59, 0
    %v65 = vsel %vm61, %v46, 0
    %v68 = vsel %vm61, %v48, 0
    %v71 = vsel %vm61, %v50, 0
    %73 = vmatprep.subr.mxu0 0.0
    %74 = vmatpush1.xpose.msra.mxu0 0.0
    %75 = vmatprep.subr.mxu0 0.0
    %76 = vmatpush1.xpose.msra.mxu0 0.0
    %77 = vmatprep.subr.mxu0 0.0
    %78 = vmatpush1.xpose.msra.mxu0 0.0
    %79 = vmatprep.subr.mxu0 0.0
    %80 = vmatpush1.xpose.msra.mxu0 0.0
    %81 = vmatprep.subr.mxu0 0.0
    %82 = vmatpush1.xpose.msra.mxu0 0.0
    %83 = vmatprep.subr.mxu0 0.0
    %84 = vmatpush1.xpose.msra.mxu0 0.0
    %85 = vmatprep.subr.mxu0 0.0
    %86 = vmatpush1.xpose.msra.mxu0 0.0
    %87 = vmatprep.subr.mxu0 0.0
    %88 = vmatpush1.xpose.msra.mxu0 0.0
    %89 = vmatprep.subr.mxu0 0.0
    %90 = vmatpush1.xpose.msra.mxu0 0.0
    %91 = vmatprep.subr.mxu0 0.0
    %92 = vmatpush1.xpose.msra.mxu0 0.0
    %93 = vmatprep.subr.mxu0 0.0
    %94 = vmatpush1.xpose.msra.mxu0 0.0
    %95 = vmatprep.subr.mxu0 0.0
    %96 = vmatpush1.xpose.msra.mxu0 0.0
    %97 = vmatprep.subr.mxu0 0.0
    %98 = vmatpush1.xpose.msra.mxu0 0.0
    %99 = vmatprep.subr.mxu0 %v71
    %100 = vmatpush1.xpose.msra.mxu0 %v49
    %101 = vmatprep.subr.mxu0 %v68
    %102 = vmatpush1.xpose.msra.mxu0 %v47
    %103 = vmatprep.subr.mxu0 %v65
    %104 = vmatpush1.xpose.msra.mxu0 %v45
    %105 = vmatprep.subr.mxu0 0.0
    %106 = vmatpush2.xpose.msra.mxu0 0.0
    %107 = vmatprep.subr.mxu0 0.0
    %108 = vmatpush2.xpose.msra.mxu0 0.0
    %109 = vmatprep.subr.mxu0 0.0
    %110 = vmatpush2.xpose.msra.mxu0 0.0
    %111 = vmatprep.subr.mxu0 0.0
    %112 = vmatpush2.xpose.msra.mxu0 0.0
    %113 = vmatprep.subr.mxu0 0.0
    %114 = vmatpush2.xpose.msra.mxu0 0.0
    %115 = vmatprep.subr.mxu0 0.0
    %116 = vmatpush2.xpose.msra.mxu0 0.0
    %117 = vmatprep.subr.mxu0 0.0
    %118 = vmatpush2.xpose.msra.mxu0 0.0
    %119 = vmatprep.subr.mxu0 0.0
    %120 = vmatpush2.xpose.msra.mxu0 0.0
    %121 = vmatprep.subr.mxu0 0.0
    %122 = vmatpush2.xpose.msra.mxu0 0.0
    %123 = vmatprep.subr.mxu0 0.0
    %124 = vmatpush2.xpose.msra.mxu0 0.0
    %125 = vmatprep.subr.mxu0 0.0
    %126 = vmatpush2.xpose.msra.mxu0 0.0
    %127 = vmatprep.subr.mxu0 0.0
    %128 = vmatpush2.xpose.msra.mxu0 0.0
    %129 = vmatprep.subr.mxu0 0.0
    %130 = vmatpush2.xpose.msra.mxu0 0.0
    %131 = vmatprep.subr.mxu0 0.0
    %132 = vmatpush2.xpose.msra.mxu0 0.0
    %133 = vmatprep.subr.mxu0 0.0
    %134 = vmatpush2.xpose.msra.mxu0 0.0
    %135 = vmatprep.subr.mxu0 0.0
    %136 = vmatpush2.xpose.msra.mxu0 0.0
    %137 = vmatprep.mubr.f32.mxu0 %v62
    %138 = vmatmul.mubr.f32.gmra.mxu0 %v58
    %v139 = vpop.f32.mrf.mxu0
    %v140 = vadd.f32 0.0, %v139
    %v141 = vpop.f32.mrf.mxu0
    %142 = vdwg.mxu0
    %v143 = vmul.f32 %v44, %v44
    %v146 = vunpack.c.l.s4 1983009808
    %v147 = vunpack.c.0.s8 %v146
    %v148 = vlaneseq
    %v149 = vshrl.u32 %v148, 7
    %v150 = vsub.s32 %v147, %v149
    %v151 = vrot.slane %v143, %v150
    %v152 = vcombine.high %v151, %v151
    %v154 = vsel %vm61, %v152, 0
    %156 = vmatprep.subr.mxu0 0.0
    %157 = vmatpush1.xpose.msra.mxu0 0.0
    %158 = vmatprep.subr.mxu0 0.0
    %159 = vmatpush1.xpose.msra.mxu0 0.0
    %160 = vmatprep.subr.mxu0 0.0
    %161 = vmatpush1.xpose.msra.mxu0 0.0
    %162 = vmatprep.subr.mxu0 0.0
    %163 = vmatpush1.xpose.msra.mxu0 0.0
    %164 = vmatprep.subr.mxu0 0.0
    %165 = vmatpush1.xpose.msra.mxu0 0.0
    %166 = vmatprep.subr.mxu0 0.0
    %167 = vmatpush1.xpose.msra.mxu0 0.0
    %168 = vmatprep.subr.mxu0 0.0
    %169 = vmatpush1.xpose.msra.mxu0 0.0
    %170 = vmatprep.subr.mxu0 0.0
    %171 = vmatpush1.xpose.msra.mxu0 0.0
    %172 = vmatprep.subr.mxu0 0.0
    %173 = vmatpush1.xpose.msra.mxu0 0.0
    %174 = vmatprep.subr.mxu0 0.0
    %175 = vmatpush1.xpose.msra.mxu0 0.0
    %176 = vmatprep.subr.mxu0 0.0
    %177 = vmatpush1.xpose.msra.mxu0 0.0
    %178 = vmatprep.subr.mxu0 0.0
    %179 = vmatpush1.xpose.msra.mxu0 0.0
    %180 = vmatprep.subr.mxu0 0.0
    %181 = vmatpush1.xpose.msra.mxu0 0.0
    %182 = vmatprep.subr.mxu0 %v71
    %183 = vmatpush1.xpose.msra.mxu0 %v49
    %184 = vmatprep.subr.mxu0 %v68
    %185 = vmatpush1.xpose.msra.mxu0 %v47
    %186 = vmatprep.subr.mxu0 %v65
    %187 = vmatpush1.xpose.msra.mxu0 %v45
    %188 = vmatprep.subr.mxu0 0.0
    %189 = vmatpush2.xpose.msra.mxu0 0.0
    %190 = vmatprep.subr.mxu0 0.0
    %191 = vmatpush2.xpose.msra.mxu0 0.0
    %192 = vmatprep.subr.mxu0 0.0
    %193 = vmatpush2.xpose.msra.mxu0 0.0
    %194 = vmatprep.subr.mxu0 0.0
    %195 = vmatpush2.xpose.msra.mxu0 0.0
    %196 = vmatprep.subr.mxu0 0.0
    %197 = vmatpush2.xpose.msra.mxu0 0.0
    %198 = vmatprep.subr.mxu0 0.0
    %199 = vmatpush2.xpose.msra.mxu0 0.0
    %200 = vmatprep.subr.mxu0 0.0
    %201 = vmatpush2.xpose.msra.mxu0 0.0
    %202 = vmatprep.subr.mxu0 0.0
    %203 = vmatpush2.xpose.msra.mxu0 0.0
    %204 = vmatprep.subr.mxu0 0.0
    %205 = vmatpush2.xpose.msra.mxu0 0.0
    %206 = vmatprep.subr.mxu0 0.0
    %207 = vmatpush2.xpose.msra.mxu0 0.0
    %208 = vmatprep.subr.mxu0 0.0
    %209 = vmatpush2.xpose.msra.mxu0 0.0
    %210 = vmatprep.subr.mxu0 0.0
    %211 = vmatpush2.xpose.msra.mxu0 0.0
    %212 = vmatprep.subr.mxu0 0.0
    %213 = vmatpush2.xpose.msra.mxu0 0.0
    %214 = vmatprep.subr.mxu0 0.0
    %215 = vmatpush2.xpose.msra.mxu0 0.0
    %216 = vmatprep.subr.mxu0 0.0
    %217 = vmatpush2.xpose.msra.mxu0 0.0
    %218 = vmatprep.subr.mxu0 0.0
    %219 = vmatpush2.xpose.msra.mxu0 0.0
    %220 = vmatprep.mubr.f32.mxu0 %v154
    %221 = vmatmul.mubr.f32.gmra.mxu0 %v151
    %v222 = vpop.f32.mrf.mxu0
    %v223 = vadd.f32 0.0, %v222
    %v224 = vpop.f32.mrf.mxu0
    %225 = vdwg.mxu0
    %v226 = vmul.f32 %v140, 0.125
    %v227 = vmul.f32 %v226, %v140
    %v228 = vsub.f32 %v223, %v227
    %v229 = vmul.f32 %v228, 0.14285715
    %v230 = vmax.f32 %v229, 0.0
    %v231 = vadd.f32 %v230, 1e-08
    %v232 = vrsqrt.pop %v231
    %v233 = vld [vmem:[%s2] sm:$0x1]
    %v234 = vld [vmem:[%s3] sm:$0x1]
    %v236 = vlaneseq
    %v237 = vshrl.u32 %v236, 7
    %v238 = vsub.s32 0, %v237
    %v239 = vrot.slane %v233, %v238
    %v241 = vmul.f32 %v239, %v232
    %v242 = vmul.f32 %v226, %v241
    %v244 = vlaneseq
    %v245 = vshrl.u32 %v244, 7
    %v246 = vsub.s32 0, %v245
    %v247 = vrot.slane %v234, %v246
    %v249 = vsub.f32 %v247, %v242
    %vm250 = vcmask 171008
    %v252 = vsel %vm250, %v241, 0
    %vm254 = vcmask 1044480
    %v256 = vsel %vm254, %v49, 0
    %v258 = vsel %vm254, %v50, 0
    %260 = vmatprep.subr.mxu0 0.0
    %261 = vmatpush1.msra.mxu0 0.0
    %262 = vmatprep.subr.mxu0 0.0
    %263 = vmatpush1.msra.mxu0 0.0
    %264 = vmatprep.subr.mxu0 0.0
    %265 = vmatpush1.msra.mxu0 0.0
    %266 = vmatprep.subr.mxu0 0.0
    %267 = vmatpush1.msra.mxu0 0.0
    %268 = vmatprep.subr.mxu0 0.0
    %269 = vmatpush1.msra.mxu0 0.0
    %270 = vmatprep.subr.mxu0 0.0
    %271 = vmatpush1.msra.mxu0 0.0
    %272 = vmatprep.subr.mxu0 0.0
    %273 = vmatpush1.msra.mxu0 0.0
    %274 = vmatprep.subr.mxu0 0.0
    %275 = vmatpush1.msra.mxu0 0.0
    %276 = vmatprep.subr.mxu0 0.0
    %277 = vmatpush1.msra.mxu0 0.0
    %278 = vmatprep.subr.mxu0 0.0
    %279 = vmatpush1.msra.mxu0 0.0
    %280 = vmatprep.subr.mxu0 0.0
    %281 = vmatpush1.msra.mxu0 0.0
    %282 = vmatprep.subr.mxu0 0.0
    %283 = vmatpush1.msra.mxu0 0.0
    %284 = vmatprep.subr.mxu0 0.0
    %285 = vmatpush1.msra.mxu0 0.0
    %286 = vmatprep.subr.mxu0 %v258
    %287 = vmatpush1.msra.mxu0 %v256
    %288 = vmatprep.subr.mxu0 %v48
    %289 = vmatpush1.msra.mxu0 %v47
    %290 = vmatprep.subr.mxu0 %v46
    %291 = vmatpush1.msra.mxu0 %v45
    %292 = vmatprep.subr.mxu0 0.0
    %293 = vmatpush2.msra.mxu0 0.0
    %294 = vmatprep.subr.mxu0 0.0
    %295 = vmatpush2.msra.mxu0 0.0
    %296 = vmatprep.subr.mxu0 0.0
    %297 = vmatpush2.msra.mxu0 0.0
    %298 = vmatprep.subr.mxu0 0.0
    %299 = vmatpush2.msra.mxu0 0.0
    %300 = vmatprep.subr.mxu0 0.0
    %301 = vmatpush2.msra.mxu0 0.0
    %302 = vmatprep.subr.mxu0 0.0
    %303 = vmatpush2.msra.mxu0 0.0
    %304 = vmatprep.subr.mxu0 0.0
    %305 = vmatpush2.msra.mxu0 0.0
    %306 = vmatprep.subr.mxu0 0.0
    %307 = vmatpush2.msra.mxu0 0.0
    %308 = vmatprep.subr.mxu0 0.0
    %309 = vmatpush2.msra.mxu0 0.0
    %310 = vmatprep.subr.mxu0 0.0
    %311 = vmatpush2.msra.mxu0 0.0
    %312 = vmatprep.subr.mxu0 0.0
    %313 = vmatpush2.msra.mxu0 0.0
    %314 = vmatprep.subr.mxu0 0.0
    %315 = vmatpush2.msra.mxu0 0.0
    %316 = vmatprep.subr.mxu0 0.0
    %317 = vmatpush2.msra.mxu0 0.0
    %318 = vmatprep.subr.mxu0 0.0
    %319 = vmatpush2.msra.mxu0 0.0
    %320 = vmatprep.subr.mxu0 0.0
    %321 = vmatpush2.msra.mxu0 0.0
    %322 = vmatprep.subr.mxu0 0.0
    %323 = vmatpush2.msra.mxu0 0.0
    %324 = vmatprep.mubr.f32.mxu0 0.0
    %325 = vmatmul.mubr.f32.gmra.mxu0 %v252
    %v326 = vpop.f32.mrf.mxu0
    %v327 = vadd.f32 0.0, %v326
    %v328 = vpop.f32.mrf.mxu0
    %v329 = vadd.f32 0.0, %v328
    %330 = vdwg.mxu0
    %v332 = vsel %vm250, %v249, 0
    %334 = vmatprep.subr.mxu0 0.0
    %335 = vmatpush1.msra.mxu0 0.0
    %336 = vmatprep.subr.mxu0 0.0
    %337 = vmatpush1.msra.mxu0 0.0
    %338 = vmatprep.subr.mxu0 0.0
    %339 = vmatpush1.msra.mxu0 0.0
    %340 = vmatprep.subr.mxu0 0.0
    %341 = vmatpush1.msra.mxu0 0.0
    %342 = vmatprep.subr.mxu0 0.0
    %343 = vmatpush1.msra.mxu0 0.0
    %344 = vmatprep.subr.mxu0 0.0
    %345 = vmatpush1.msra.mxu0 0.0
    %346 = vmatprep.subr.mxu0 0.0
    %347 = vmatpush1.msra.mxu0 0.0
    %348 = vmatprep.subr.mxu0 0.0
    %349 = vmatpush1.msra.mxu0 0.0
    %350 = vmatprep.subr.mxu0 0.0
    %351 = vmatpush1.msra.mxu0 0.0
    %352 = vmatprep.subr.mxu0 0.0
    %353 = vmatpush1.msra.mxu0 0.0
    %354 = vmatprep.subr.mxu0 0.0
    %355 = vmatpush1.msra.mxu0 0.0
    %356 = vmatprep.subr.mxu0 0.0
    %357 = vmatpush1.msra.mxu0 0.0
    %358 = vmatprep.subr.mxu0 0.0
    %359 = vmatpush1.msra.mxu0 0.0
    %360 = vmatprep.subr.mxu0 %v258
    %361 = vmatpush1.msra.mxu0 %v256
    %362 = vmatprep.subr.mxu0 %v48
    %363 = vmatpush1.msra.mxu0 %v47
    %364 = vmatprep.subr.mxu0 %v46
    %365 = vmatpush1.msra.mxu0 %v45
    %366 = vmatprep.subr.mxu0 0.0
    %367 = vmatpush2.msra.mxu0 0.0
    %368 = vmatprep.subr.mxu0 0.0
    %369 = vmatpush2.msra.mxu0 0.0
    %370 = vmatprep.subr.mxu0 0.0
    %371 = vmatpush2.msra.mxu0 0.0
    %372 = vmatprep.subr.mxu0 0.0
    %373 = vmatpush2.msra.mxu0 0.0
    %374 = vmatprep.subr.mxu0 0.0
    %375 = vmatpush2.msra.mxu0 0.0
    %376 = vmatprep.subr.mxu0 0.0
    %377 = vmatpush2.msra.mxu0 0.0
    %378 = vmatprep.subr.mxu0 0.0
    %379 = vmatpush2.msra.mxu0 0.0
    %380 = vmatprep.subr.mxu0 0.0
    %381 = vmatpush2.msra.mxu0 0.0
    %382 = vmatprep.subr.mxu0 0.0
    %383 = vmatpush2.msra.mxu0 0.0
    %384 = vmatprep.subr.mxu0 0.0
    %385 = vmatpush2.msra.mxu0 0.0
    %386 = vmatprep.subr.mxu0 0.0
    %387 = vmatpush2.msra.mxu0 0.0
    %388 = vmatprep.subr.mxu0 0.0
    %389 = vmatpush2.msra.mxu0 0.0
    %390 = vmatprep.subr.mxu0 0.0
    %391 = vmatpush2.msra.mxu0 0.0
    %392 = vmatprep.subr.mxu0 0.0
    %393 = vmatpush2.msra.mxu0 0.0
    %394 = vmatprep.subr.mxu0 0.0
    %395 = vmatpush2.msra.mxu0 0.0
    %396 = vmatprep.subr.mxu0 0.0
    %397 = vmatpush2.msra.mxu0 0.0
    %398 = vmatprep.mubr.f32.mxu0 0.0
    %399 = vmatmul.mubr.f32.gmra.mxu0 %v332
    %v400 = vpop.f32.mrf.mxu0
    %v401 = vadd.f32 0.0, %v400
    %v402 = vpop.f32.mrf.mxu0
    %v403 = vadd.f32 0.0, %v402
    %404 = vdwg.mxu0
    %v407 = vcombine.low %v327, %v329
    %v409 = vunpack.c.l.s4 1983009808
    %v410 = vunpack.c.0.s8 %v409
    %v411 = vlaneseq
    %v412 = vshrl.u32 %v411, 7
    %v413 = vsub.s32 %v410, %v412
    %v414 = vrot.slane %v407, %v413
    %v416 = vmul.f32 %v44, %v414
    %v419 = vcombine.low %v401, %v403
    %v421 = vunpack.c.l.s4 1983009808
    %v422 = vunpack.c.0.s8 %v421
    %v423 = vlaneseq
    %v424 = vshrl.u32 %v423, 7
    %v425 = vsub.s32 %v422, %v424
    %v426 = vrot.slane %v419, %v425
    %v428 = vadd.f32 %v416, %v426
    %vm429 = vcmask 1041408
    %vm430 = vcmask 322562
    %vm431 = vmor %vm430, %vm429
    %432 = vst.msk [vmem:[#allocation7] sm:$0xf] %vm431, %v428
    // Predicated region
    $region26: #{tpu_custom_call.1} parent=1 // pred_check
      _
    $region27: #{tpu_custom_call.1} parent=1 // pred_check_branch
      %434 = sbr.rel (0) target = $region29
    $region28: #{tpu_custom_call.1} parent=1 // pred_region
      %s436 = ssub.s32 64, 64
      %437 = vsyncadd [#allocation4], %s436
      %s439 = sshll.u32 [#allocation7], 4
      %s440 = int_to_ptr.vmem [resolvable:$true] %s439
      %442 = dma.vmem_to_hbm [thread:$0]  %s440, 64, %s4, [#allocation4]
    $region29: #{tpu_custom_call.1} parent=1 // pred_fallthru
      _
    // Predicated region
    $region30: #{tpu_custom_call.1} parent=1 // pred_check
      _
    $region31: #{tpu_custom_call.1} parent=1 // pred_check_branch
      %444 = sbr.rel (0) target = $region33
    $region32: #{tpu_custom_call.1} parent=1 // pred_region
      %445 = dma.done [#allocation4], 64
    $region33: #{tpu_custom_call.1} parent=1 // pred_fallthru
      _
    %446 = vsyncpa [#allocation3], 1
    %447 = vsyncpa [#allocation6], 1
    %448 = vsyncpa [#allocation4], 1

</llo_original>
